<compile_context>
chip_gen: v6e
topology: v6e:2x2x1
jax: 0.10.0
libtpu: 0.0.40
codegen_flags: <defaults>
</compile_context>

<pallas_src>
import functools

import jax
import jax.numpy as jnp
from jax.experimental import pallas as pl
from jax.experimental.pallas import tpu as pltpu


# ----------------------------- Pallas kernel ------------------------------ #
def _nmf_kernel(act_ref, w1_ref, w2_ref, sp_ref, out_ref, *, d_gmf, d_mlp, h1, h2):
    """Fused NMF forward for one batch tile (feature-major layout).

    act_ref : (2*Dg + 2*Dm, TB) bf16  packed [gmf_u; gmf_i; mlp_u; mlp_i] (+bias)
    w1_ref  : (H1, 2*Dm) bf16         first MLP layer, torch (out, in) layout
    w2_ref  : (H2, H1)   bf16         second MLP layer
    sp_ref  : (H1+H2+Dg+H2+1, 1) f32  packed column [b1 | b2 | wg | wm | last_bias]
    out_ref : (1, TB) f32             lane-dense sigmoid output row
    """
    f_gmf = 2 * d_gmf
    act = act_ref[...]                                        # (F, TB) bf16
    gmf_u = act[:d_gmf, :].astype(jnp.float32)                # (Dg, TB)
    gmf_i = act[d_gmf:f_gmf, :].astype(jnp.float32)           # (Dg, TB)
    act_mlp = act[f_gmf:, :]                                  # (2*Dm, TB) bf16

    sp = sp_ref[...]                                          # (S, 1) f32
    o = 0
    b1 = sp[o:o + h1, :]; o += h1                             # (H1, 1)
    b2 = sp[o:o + h2, :]; o += h2                             # (H2, 1)
    wg = sp[o:o + d_gmf, :]; o += d_gmf                       # (Dg, 1)
    wm = sp[o:o + h2, :]; o += h2                             # (H2, 1)
    bl = sp[o:o + 1, :]                                       # (1, 1)

    # MLP branch, feature-major: MXU output N-dim = TB (all lanes busy).
    z1 = jnp.dot(w1_ref[...], act_mlp,
                 preferred_element_type=jnp.float32) + b1     # (H1, TB)
    z1 = jnp.maximum(z1, 0.0)
    z2 = jnp.dot(w2_ref[...], z1.astype(w2_ref.dtype),
                 preferred_element_type=jnp.float32) + b2     # (H2, TB)
    z2 = jnp.maximum(z2, 0.0)

    # GMF branch + last Linear(merged_dim, 1): sublane reductions, no relayout.
    gmf = gmf_u * gmf_i                                       # (Dg, TB)
    dot_g = jnp.sum(gmf * wg, axis=0, keepdims=True)          # (1, TB)
    dot_m = jnp.sum(z2 * wm, axis=0, keepdims=True)           # (1, TB)
    out_ref[...] = jax.nn.sigmoid(dot_g + dot_m + bl)


def nmf_pallas(act, w1, w2, sp, *, d_gmf, d_mlp, tile_b):
    """Batch-tiled pallas_call. `act` batch dim must already be padded to tile_b."""
    f_total, bp = act.shape
    h1, k1 = w1.shape
    h2, _ = w2.shape
    assert tile_b % 128 == 0, "tile_b must be a multiple of 128 (lane width)"
    assert bp % tile_b == 0, "batch must be padded to a multiple of tile_b"
    num_tiles = bp // tile_b

    kernel = functools.partial(_nmf_kernel, d_gmf=d_gmf, d_mlp=d_mlp, h1=h1, h2=h2)

    # Advisory cost estimate (matmuls + elementwise; sigmoid ~ 1 transcendental/row).
    flops = 2 * bp * (k1 * h1 + h1 * h2) + bp * (3 * d_gmf + 3 * h2 + 4)
    bytes_accessed = (act.size * act.dtype.itemsize
                      + 4 * bp
                      + (w1.size + w2.size) * w1.dtype.itemsize
                      + sp.size * 4)

    return pl.pallas_call(
        kernel,
        out_shape=jax.ShapeDtypeStruct((1, bp), jnp.float32),
        grid=(num_tiles,),
        in_specs=[
            pl.BlockSpec((f_total, tile_b), lambda i: (0, i)),   # packed activations
            pl.BlockSpec(w1.shape, lambda i: (0, 0)),            # resident weights
            pl.BlockSpec(w2.shape, lambda i: (0, 0)),
            pl.BlockSpec(sp.shape, lambda i: (0, 0)),            # packed small params
        ],
        out_specs=pl.BlockSpec((1, tile_b), lambda i: (0, i)),
        compiler_params=pltpu.CompilerParams(
            dimension_semantics=("parallel",),                   # megacore-shardable on v7x
            vmem_limit_bytes=32 * 1024 * 1024,
        ),
        cost_estimate=pl.CostEstimate(
            flops=flops, transcendentals=bp, bytes_accessed=bytes_accessed),
    )(act, w1, w2, sp)


# ----------------------------- Parameter init ------------------------------ #
def xavier_normal(key, shape):
    # nn.init.xavier_normal_ on a (out, in) weight: std = sqrt(2 / (in + out)).
    fan_out, fan_in = shape
    std = jnp.sqrt(2.0 / (fan_in + fan_out))
    return jax.random.normal(key, shape, dtype=jnp.float32) * std


def make_params(key, user_count, item_count, d_gmf, d_mlp, hidden_dims):
    ks = list(jax.random.split(key, 16))
    p = {}
    # GMF embeddings (xavier normal) + zero biases
    p["gmf_user_emb"] = xavier_normal(ks[0], (user_count, d_gmf))
    p["gmf_item_emb"] = xavier_normal(ks[1], (item_count, d_gmf))
    p["gmf_user_bias"] = jnp.zeros((user_count, 1), jnp.float32)
    p["gmf_item_bias"] = jnp.zeros((item_count, 1), jnp.float32)
    # MLP embeddings + zero biases
    p["mlp_user_emb"] = xavier_normal(ks[2], (user_count, d_mlp))
    p["mlp_item_emb"] = xavier_normal(ks[3], (item_count, d_mlp))
    p["mlp_user_bias"] = jnp.zeros((user_count, 1), jnp.float32)
    p["mlp_item_bias"] = jnp.zeros((item_count, 1), jnp.float32)
    # MLP hidden layers: Linear(d_in, d_out), xavier weight, bias ~ N(0, 0.001)
    dims = [2 * d_mlp] + hidden_dims
    p["mlp_layers"] = []
    ki = 4
    for d_in, d_out in zip(dims[:-1], dims[1:]):
        w = xavier_normal(ks[ki], (d_out, d_in))          # torch layout (out, in)
        b = jax.random.normal(ks[ki + 1], (d_out,), jnp.float32) * 0.001
        p["mlp_layers"].append((w, b))
        ki += 2
    # Last layer: Linear(merged_dim, 1)
    merged_dim = d_gmf + (hidden_dims[-1] if hidden_dims else 2 * d_mlp)
    p["last_w"] = xavier_normal(ks[ki], (1, merged_dim))
    p["last_b"] = jax.random.normal(ks[ki + 1], (1,), jnp.float32) * 0.001
    return p


# ----------------------------- Forward wrapper ----------------------------- #
@functools.partial(jax.jit, static_argnames=("tile_b",))
def nmf_forward(params, user, item, tile_b=4096):
    # All dims derived from STATIC shapes -> every weight slice is static under jit.
    d_gmf = params["gmf_user_emb"].shape[1]
    d_mlp = params["mlp_user_emb"].shape[1]
    batch = user.shape[0]

    num_tiles = pl.cdiv(batch, tile_b)
    bp = num_tiles * tile_b
    pad = bp - batch
    user_p = jnp.pad(user, (0, pad))            # pad indices (cheap), slice output later
    item_p = jnp.pad(item, (0, pad))

    # --- glue: embedding gathers (data-dependent indexing kept in JAX) ---
    gmf_u = params["gmf_user_emb"][user_p] + params["gmf_user_bias"][user_p]   # (Bp, Dg)
    gmf_i = params["gmf_item_emb"][item_p] + params["gmf_item_bias"][item_p]   # (Bp, Dg)
    mlp_u = params["mlp_user_emb"][user_p] + params["mlp_user_bias"][user_p]   # (Bp, Dm)
    mlp_i = params["mlp_item_emb"][item_p] + params["mlp_item_bias"][item_p]   # (Bp, Dm)

    # Single packed, feature-major, bf16 activation slab: (2*Dg + 2*Dm, Bp).
    act = jnp.concatenate([gmf_u, gmf_i, mlp_u, mlp_i], axis=1).T.astype(jnp.bfloat16)

    assert len(params["mlp_layers"]) == 2, "kernel specialised for 2 MLP hidden layers"
    (w1, b1), (w2, b2) = params["mlp_layers"]   # torch (out, in) layout used as-is
    w1b = w1.astype(jnp.bfloat16)               # (H1, 2*Dm)
    w2b = w2.astype(jnp.bfloat16)               # (H2, H1)
    # Packed small-params column: [b1 | b2 | wg (Dg) | wm (H2) | last_bias]
    sp = jnp.concatenate([b1, b2,
                          params["last_w"][0, :d_gmf],
                          params["last_w"][0, d_gmf:],
                          params["last_b"]]).astype(jnp.float32)[:, None]

    out_row = nmf_pallas(act, w1b, w2b, sp, d_gmf=d_gmf, d_mlp=d_mlp, tile_b=tile_b)
    return out_row[0, :batch]                   # == .squeeze() of the (B, 1) logits


def nmf_forward_ref(params, user, item):
    """Pure-JAX reference (mirrors the PyTorch forward, f32 throughout)."""
    gmf_u = params["gmf_user_emb"][user] + params["gmf_user_bias"][user]
    gmf_i = params["gmf_item_emb"][item] + params["gmf_item_bias"][item]
    gmf_vec = gmf_u * gmf_i
    mlp_u = params["mlp_user_emb"][user] + params["mlp_user_bias"][user]
    mlp_i = params["mlp_item_emb"][item] + params["mlp_item_bias"][item]
    h = jnp.concatenate([mlp_u, mlp_i], axis=-1)
    for w, b in params["mlp_layers"]:
        h = jnp.maximum(h @ w.T + b, 0.0)
    merged = jnp.concatenate([gmf_vec, h], axis=1)
    logit = merged @ params["last_w"].T + params["last_b"]
    return jax.nn.sigmoid(logit)[:, 0]


# --------------------------------- Main ------------------------------------ #
if __name__ == "__main__":
    user_count, item_count = 50, 40
    d_gmf, d_mlp = 8, 8
    hidden_dims = [32, 16]
    batch = 300          # not a multiple of tile_b -> exercises padding + multi-tile grid
    tile_b = 256         # small tile for the demo; use 4096-8192 for real batches

    key = jax.random.PRNGKey(0)
    k_params, k_u, k_i = jax.random.split(key, 3)
    params = make_params(k_params, user_count, item_count, d_gmf, d_mlp, hidden_dims)

    user = jax.random.randint(k_u, (batch,), 0, user_count, dtype=jnp.int32)
    item = jax.random.randint(k_i, (batch,), 0, item_count, dtype=jnp.int32)

    out = nmf_forward(params, user, item, tile_b=tile_b)
    out = jax.block_until_ready(out)

    ref = nmf_forward_ref(params, user, item)
    assert out.shape == (batch,)
    # bf16 activations/weights in the kernel -> relaxed tolerance vs f32 reference.
    assert jnp.allclose(out, ref, atol=1e-2, rtol=1e-2), (out, ref)

    print("KERNEL_OK")
</pallas_src>

<mosaic_0001>
module attributes {stable_mosaic.version = 11 : i64} {
  func.func @_nmf_kernel(%arg0: i32, %arg1: memref<32x256xbf16, #tpu.memory_space<vmem>>, %arg2: memref<32x16xbf16, #tpu.memory_space<vmem>>, %arg3: memref<16x32xbf16, #tpu.memory_space<vmem>>, %arg4: memref<73x1xf32, #tpu.memory_space<vmem>>, %arg5: memref<1x256xf32, #tpu.memory_space<vmem>>) attributes {dimension_semantics = [#tpu.dimension_semantics<parallel>], iteration_bounds = array<i64: 2>, scalar_prefetch = 0 : i64, scratch_operands = 0 : i64, tpu.core_type = #tpu.core_type<tc>, window_params = [{transform_indices = @transform_0, window_bounds = array<i64: 32, 256>}, {pipeline_mode = #tpu.pipeline_mode<synchronous>, transform_indices = @transform_1, window_bounds = array<i64: 32, 16>}, {pipeline_mode = #tpu.pipeline_mode<synchronous>, transform_indices = @transform_2, window_bounds = array<i64: 16, 32>}, {pipeline_mode = #tpu.pipeline_mode<synchronous>, transform_indices = @transform_3, window_bounds = array<i64: 73, 1>}, {transform_indices = @transform_4, window_bounds = array<i64: 1, 256>}]} {
    %c0 = arith.constant 0 : index
    %c0_0 = arith.constant 0 : index
    %0 = vector.load %arg1[%c0, %c0_0] : memref<32x256xbf16, #tpu.memory_space<vmem>>, vector<32x256xbf16>
    %1 = vector.extract_strided_slice %0 {offsets = [0, 0], sizes = [8, 256], strides = [1, 1]} : vector<32x256xbf16> to vector<8x256xbf16>
    %2 = arith.extf %1 : vector<8x256xbf16> to vector<8x256xf32>
    %3 = vector.extract_strided_slice %0 {offsets = [8, 0], sizes = [8, 256], strides = [1, 1]} : vector<32x256xbf16> to vector<8x256xbf16>
    %4 = arith.extf %3 : vector<8x256xbf16> to vector<8x256xf32>
    %5 = vector.extract_strided_slice %0 {offsets = [16, 0], sizes = [16, 256], strides = [1, 1]} : vector<32x256xbf16> to vector<16x256xbf16>
    %c0_1 = arith.constant 0 : index
    %c0_2 = arith.constant 0 : index
    %6 = vector.load %arg4[%c0_1, %c0_2] : memref<73x1xf32, #tpu.memory_space<vmem>>, vector<73x1xf32>
    %7 = vector.extract_strided_slice %6 {offsets = [0, 0], sizes = [32, 1], strides = [1, 1]} : vector<73x1xf32> to vector<32x1xf32>
    %8 = vector.extract_strided_slice %6 {offsets = [32, 0], sizes = [16, 1], strides = [1, 1]} : vector<73x1xf32> to vector<16x1xf32>
    %9 = vector.extract_strided_slice %6 {offsets = [48, 0], sizes = [8, 1], strides = [1, 1]} : vector<73x1xf32> to vector<8x1xf32>
    %10 = vector.extract_strided_slice %6 {offsets = [56, 0], sizes = [16, 1], strides = [1, 1]} : vector<73x1xf32> to vector<16x1xf32>
    %11 = vector.extract_strided_slice %6 {offsets = [72, 0], sizes = [1, 1], strides = [1, 1]} : vector<73x1xf32> to vector<1x1xf32>
    %c0_3 = arith.constant 0 : index
    %c0_4 = arith.constant 0 : index
    %12 = vector.load %arg2[%c0_3, %c0_4] : memref<32x16xbf16, #tpu.memory_space<vmem>>, vector<32x16xbf16>
    %cst = arith.constant dense<0.000000e+00> : vector<32x256xf32>
    %13 = tpu.matmul %12, %5, %cst {dimension_numbers = #tpu.dot_dimension_numbers<[1], [0], [0], [1], [0, 0, 1, 1], [], []>} : vector<32x16xbf16>, vector<16x256xbf16>, vector<32x256xf32> -> vector<32x256xf32>
    %14 = vector.broadcast %7 : vector<32x1xf32> to vector<32x256xf32>
    %15 = arith.addf %13, %14 : vector<32x256xf32>
    %cst_5 = arith.constant 0.000000e+00 : f32
    %16 = vector.broadcast %cst_5 : f32 to vector<32x256xf32>
    %17 = arith.maximumf %15, %16 : vector<32x256xf32>
    %c0_6 = arith.constant 0 : index
    %c0_7 = arith.constant 0 : index
    %18 = vector.load %arg3[%c0_6, %c0_7] : memref<16x32xbf16, #tpu.memory_space<vmem>>, vector<16x32xbf16>
    %19 = arith.truncf %17 : vector<32x256xf32> to vector<32x256xbf16>
    %cst_8 = arith.constant dense<0.000000e+00> : vector<16x256xf32>
    %20 = tpu.matmul %18, %19, %cst_8 {dimension_numbers = #tpu.dot_dimension_numbers<[1], [0], [0], [1], [0, 0, 1, 1], [], []>} : vector<16x32xbf16>, vector<32x256xbf16>, vector<16x256xf32> -> vector<16x256xf32>
    %21 = vector.broadcast %8 : vector<16x1xf32> to vector<16x256xf32>
    %22 = arith.addf %20, %21 : vector<16x256xf32>
    %cst_9 = arith.constant 0.000000e+00 : f32
    %23 = vector.broadcast %cst_9 : f32 to vector<16x256xf32>
    %24 = arith.maximumf %22, %23 : vector<16x256xf32>
    %25 = arith.mulf %2, %4 : vector<8x256xf32>
    %26 = vector.broadcast %9 : vector<8x1xf32> to vector<8x256xf32>
    %27 = arith.mulf %25, %26 : vector<8x256xf32>
    %cst_10 = arith.constant dense<0.000000e+00> : vector<256xf32>
    %28 = vector.multi_reduction <add>, %27, %cst_10 [0] : vector<8x256xf32> to vector<256xf32>
    %29 = vector.shape_cast %28 : vector<256xf32> to vector<1x256xf32>
    %30 = vector.broadcast %10 : vector<16x1xf32> to vector<16x256xf32>
    %31 = arith.mulf %24, %30 : vector<16x256xf32>
    %cst_11 = arith.constant dense<0.000000e+00> : vector<256xf32>
    %32 = vector.multi_reduction <add>, %31, %cst_11 [0] : vector<16x256xf32> to vector<256xf32>
    %33 = vector.shape_cast %32 : vector<256xf32> to vector<1x256xf32>
    %34 = arith.addf %29, %33 : vector<1x256xf32>
    %35 = vector.broadcast %11 : vector<1x1xf32> to vector<1x256xf32>
    %36 = arith.addf %34, %35 : vector<1x256xf32>
    %37 = arith.negf %36 : vector<1x256xf32>
    %38 = math.exp %37 : vector<1x256xf32>
    %cst_12 = arith.constant 1.000000e+00 : f32
    %39 = vector.broadcast %cst_12 : f32 to vector<1x256xf32>
    %40 = arith.addf %39, %38 : vector<1x256xf32>
    %41 = arith.divf %39, %40 : vector<1x256xf32>
    %c0_13 = arith.constant 0 : index
    %c0_14 = arith.constant 0 : index
    %42 = vector.load %arg5[%c0_13, %c0_14] : memref<1x256xf32, #tpu.memory_space<vmem>>, vector<1x256xf32>
    tpu.vector_store %arg5[%c0_13, %c0_14], %41 {strides = array<i32>} : memref<1x256xf32, #tpu.memory_space<vmem>>, vector<1x256xf32>,
    return
  }
  func.func @transform_0(%arg0: i32) -> (i32, i32) {
    %c0_i32 = arith.constant 0 : i32
    %c0_i32_0 = arith.constant 0 : i32
    return %c0_i32, %arg0 : i32, i32
  }
  func.func @transform_1(%arg0: i32) -> (i32, i32) {
    %c0_i32 = arith.constant 0 : i32
    %c0_i32_0 = arith.constant 0 : i32
    %c0_i32_1 = arith.constant 0 : i32
    return %c0_i32, %c0_i32_0 : i32, i32
  }
  func.func @transform_2(%arg0: i32) -> (i32, i32) {
    %c0_i32 = arith.constant 0 : i32
    %c0_i32_0 = arith.constant 0 : i32
    %c0_i32_1 = arith.constant 0 : i32
    return %c0_i32, %c0_i32_0 : i32, i32
  }
  func.func @transform_3(%arg0: i32) -> (i32, i32) {
    %c0_i32 = arith.constant 0 : i32
    %c0_i32_0 = arith.constant 0 : i32
    %c0_i32_1 = arith.constant 0 : i32
    return %c0_i32, %c0_i32_0 : i32, i32
  }
  func.func @transform_4(%arg0: i32) -> (i32, i32) {
    %c0_i32 = arith.constant 0 : i32
    %c0_i32_0 = arith.constant 0 : i32
    return %c0_i32, %arg0 : i32, i32
  }
}

</mosaic_0001>

<llo_original>
// kernel: nmf_forward.1
$region0: #{nmf_forward.1}
  #allocation0 [shape = 'u32[]', space=smem, size = 0x4, offset = 0x4, fixed_abs, tag = 'smem constant byte address 0x4 - core index']
  #allocation1 [shape = 'u32[144,128]{1,0:T(1,128)}', space=vmem, size = 0x12000, scoped, tag = 'internal scratch']
  %s0 = inlined_call_operand.vmem [shape: bf16[32,512], index: 0, kind: input, shape index: {}]
  %s1 = inlined_call_operand.vmem [shape: bf16[32,16], index: 1, kind: input, shape index: {}]
  %s2 = inlined_call_operand.vmem [shape: bf16[16,32], index: 2, kind: input, shape index: {}]
  %s3 = inlined_call_operand.vmem [shape: f32[73,1], index: 3, kind: input, shape index: {}]
  %s4 = inlined_call_operand.vmem [shape: f32[1,512], index: 4, kind: output, shape index: {}]
  %s5 = sld [smem:[#allocation0]]
  $region87: #{nmf_forward.1} parent=0
    _
  %s7 = ssub.s32 1, %s5
  %s8 = scalar_select 0, %s7, %s5
  $region1: #{nmf_forward.1} parent=0
    #allocation2 [shape = 'u8[32768]{0}', space=vmem, size = 0x8000, scoped, tag = 'input window, operand 0']
    loop: start=0, step=1, limit=4
    $region2: #{nmf_forward.1} parent=1 // loop_pre_header
      _
    $region3: #{nmf_forward.1} parent=1 // loop_header
      %s10 = sphi 0, %s14
      %p11 = scmp.ge.s32.totalorder %s10, 4
      %s20 = sphi 0, %s22
      %s23 = sphi 0, %s20
      %s24 = sphi 0, %s23
      %s40 = sphi 0, %s24
      %s44 = sphi 0, %s44
      %s46 = sphi 0, %s44
      %s47 = sphi 0, %s46
      %s61 = sphi 0, %s47
      %s65 = sphi 0, %s65
      %s67 = sphi 0, %s65
      %s68 = sphi 0, %s67
      %s82 = sphi 0, %s68
      %s86 = sphi 0, %s86
      %s88 = sphi 0, %s86
      %s89 = sphi 0, %s88
      %s103 = sphi 0, %s89
      %s109 = sphi 0, %s111
      %s112 = sphi 0, %s109
      %s113 = sphi 0, %s112
      %s129 = sphi 0, %s113
    $region4: #{nmf_forward.1} parent=1 // loop_header_branch
      %13 = sbr.rel (%p11) target = $region8
    $region5: #{nmf_forward.1} parent=1 // loop_body
      %s15 = ssub.s32 %s10, 1
      %s16 = ssub.s32 %s10, 2
      %s17 = sadd.s32 %s10, 1
      %s18 = ssub.s32 %s10, %s17
      %p19 = scmp.eq.s32.totalorder %s18, 0
      %s21 = sadd.s32 %s20, 1
      %s22 = scalar_select %p19, %s20, %s21
      %p25 = pneg %p19
      %p26 = scmp.eq.s32.totalorder %s10, 1
      %p27 = por %p25, %p26
      %p28 = scmp.ne.s32.totalorder %s20, %s23
      %p29 = scmp.eq.s32.totalorder %s10, 0
      %p30 = por %p28, %p29
      %p31 = scmp.ne.s32.totalorder %s20, %s23
      %p32 = scmp.eq.s32.totalorder %s15, 1
      %p33 = por %p31, %p32
      %p34 = scmp.ne.s32.totalorder %s23, %s24
      %p35 = scmp.eq.s32.totalorder %s15, 0
      %p36 = por %p34, %p35
      %p37 = scmp.ne.s32.totalorder %s23, %s24
      %p38 = scmp.eq.s32.totalorder %s16, 1
      %p39 = por %p37, %p38
      %p41 = scmp.ne.s32.totalorder %s24, %s40
      %p42 = scmp.eq.s32.totalorder %s16, 0
      %p43 = por %p41, %p42
      %s45 = sadd.s32 %s44, 1
      %p48 = scmp.eq.s32.totalorder %s10, 1
      %p49 = scmp.ne.s32.totalorder %s44, %s46
      %p50 = scmp.eq.s32.totalorder %s10, 0
      %p51 = por %p49, %p50
      %p52 = scmp.ne.s32.totalorder %s44, %s46
      %p53 = scmp.eq.s32.totalorder %s15, 1
      %p54 = por %p52, %p53
      %p55 = scmp.ne.s32.totalorder %s46, %s47
      %p56 = scmp.eq.s32.totalorder %s15, 0
      %p57 = por %p55, %p56
      %p58 = scmp.ne.s32.totalorder %s46, %s47
      %p59 = scmp.eq.s32.totalorder %s16, 1
      %p60 = por %p58, %p59
      %p62 = scmp.ne.s32.totalorder %s47, %s61
      %p63 = scmp.eq.s32.totalorder %s16, 0
      %p64 = por %p62, %p63
      %s66 = sadd.s32 %s65, 1
      %p69 = scmp.eq.s32.totalorder %s10, 1
      %p70 = scmp.ne.s32.totalorder %s65, %s67
      %p71 = scmp.eq.s32.totalorder %s10, 0
      %p72 = por %p70, %p71
      %p73 = scmp.ne.s32.totalorder %s65, %s67
      %p74 = scmp.eq.s32.totalorder %s15, 1
      %p75 = por %p73, %p74
      %p76 = scmp.ne.s32.totalorder %s67, %s68
      %p77 = scmp.eq.s32.totalorder %s15, 0
      %p78 = por %p76, %p77
      %p79 = scmp.ne.s32.totalorder %s67, %s68
      %p80 = scmp.eq.s32.totalorder %s16, 1
      %p81 = por %p79, %p80
      %p83 = scmp.ne.s32.totalorder %s68, %s82
      %p84 = scmp.eq.s32.totalorder %s16, 0
      %p85 = por %p83, %p84
      %s87 = sadd.s32 %s86, 1
      %p90 = scmp.eq.s32.totalorder %s10, 1
      %p91 = scmp.ne.s32.totalorder %s86, %s88
      %p92 = scmp.eq.s32.totalorder %s10, 0
      %p93 = por %p91, %p92
      %p94 = scmp.ne.s32.totalorder %s86, %s88
      %p95 = scmp.eq.s32.totalorder %s15, 1
      %p96 = por %p94, %p95
      %p97 = scmp.ne.s32.totalorder %s88, %s89
      %p98 = scmp.eq.s32.totalorder %s15, 0
      %p99 = por %p97, %p98
      %p100 = scmp.ne.s32.totalorder %s88, %s89
      %p101 = scmp.eq.s32.totalorder %s16, 1
      %p102 = por %p100, %p101
      %p104 = scmp.ne.s32.totalorder %s89, %s103
      %p105 = scmp.eq.s32.totalorder %s16, 0
      %p106 = por %p104, %p105
      %s107 = ssub.s32 %s10, %s17
      %p108 = scmp.eq.s32.totalorder %s107, 0
      %s110 = sadd.s32 %s109, 1
      %s111 = scalar_select %p108, %s109, %s110
      %p114 = pneg %p108
      %p115 = scmp.eq.s32.totalorder %s10, 1
      %p116 = por %p114, %p115
      %p117 = scmp.ne.s32.totalorder %s109, %s112
      %p118 = scmp.eq.s32.totalorder %s10, 0
      %p119 = por %p117, %p118
      %p120 = scmp.ne.s32.totalorder %s109, %s112
      %p121 = scmp.eq.s32.totalorder %s15, 1
      %p122 = por %p120, %p121
      %p123 = scmp.ne.s32.totalorder %s112, %s113
      %p124 = scmp.eq.s32.totalorder %s15, 0
      %p125 = por %p123, %p124
      %p126 = scmp.ne.s32.totalorder %s112, %s113
      %p127 = scmp.eq.s32.totalorder %s16, 1
      %p128 = por %p126, %p127
      %p130 = scmp.ne.s32.totalorder %s113, %s129
      %p131 = scmp.eq.s32.totalorder %s16, 0
      %p132 = por %p130, %p131
      %p133 = scmp.le.s32.totalorder 1, %s10
      %p134 = scmp.lt.s32.totalorder %s10, 3
      %p135 = pnand %p133, %p134
      %p136 = pneg %p135
      // Predicated region
      $region9: #{nmf_forward.1} parent=5 // pred_check
        _
      $region10: #{nmf_forward.1} parent=5 // pred_check_branch
        %138 = sbr.rel (%p135) target = $region12
      $region11: #{nmf_forward.1} parent=5 // pred_region
        %s139 = ssub.s32 %s10, 1
        // Predicated region
        $region13: #{nmf_forward.1} parent=11 // pred_check
          %p140 = pneg %p57
        $region14: #{nmf_forward.1} parent=11 // pred_check_branch
          %142 = sbr.rel (%p140) target = $region16
        $region15: #{nmf_forward.1} parent=11 // pred_region
          _
        $region16: #{nmf_forward.1} parent=11 // pred_fallthru
          _
        // Predicated region
        $region17: #{nmf_forward.1} parent=11 // pred_check
          %p143 = pneg %p78
        $region18: #{nmf_forward.1} parent=11 // pred_check_branch
          %145 = sbr.rel (%p143) target = $region20
        $region19: #{nmf_forward.1} parent=11 // pred_region
          _
        $region20: #{nmf_forward.1} parent=11 // pred_fallthru
          _
        // Predicated region
        $region21: #{nmf_forward.1} parent=11 // pred_check
          %p146 = pneg %p99
        $region22: #{nmf_forward.1} parent=11 // pred_check_branch
          %148 = sbr.rel (%p146) target = $region24
        $region23: #{nmf_forward.1} parent=11 // pred_region
          _
        $region24: #{nmf_forward.1} parent=11 // pred_fallthru
          _
      $region12: #{nmf_forward.1} parent=5 // pred_fallthru
        _
      %p149 = scmp.lt.s32.totalorder %s10, 2
      // Predicated region
      $region25: #{nmf_forward.1} parent=5 // pred_check
        %p150 = pneg %p149
      $region26: #{nmf_forward.1} parent=5 // pred_check_branch
        %152 = sbr.rel (%p150) target = $region28
      $region27: #{nmf_forward.1} parent=5 // pred_region
        // Predicated region
        $region29: #{nmf_forward.1} parent=27 // pred_check
          %p153 = pneg %p30
        $region30: #{nmf_forward.1} parent=27 // pred_check_branch
          %155 = sbr.rel (%p153) target = $region32
        $region31: #{nmf_forward.1} parent=27 // pred_region
          %s156 = sand.u32 %s20, 1
          %s157 = sand.u32 %s20, 1
          %s158 = smul.addr %s157, 32
          %s159 = scalar_lea.vmem [#allocation2], %s158
          %s160 = smul.u32 2, %s10
          %s161 = smul.addr %s160, 4
          %s162 = scalar_lea.vmem %s0, %s161
          // Predicated region
          $region33: #{nmf_forward.1} parent=31 // pred_check
            _
          $region34: #{nmf_forward.1} parent=31 // pred_check_branch
            %164 = sbr.rel (0) target = $region36
          $region35: #{nmf_forward.1} parent=31 // pred_region
            // Predicated region
            $region37: #{nmf_forward.1} parent=35 // pred_check
              _
            $region38: #{nmf_forward.1} parent=35 // pred_check_branch
              %166 = sbr.rel (0) target = $region40
            $region39: #{nmf_forward.1} parent=35 // pred_region
              // Predicated region
              $region52: #{nmf_forward.1} parent=39 // pred_check
                _
              $region53: #{nmf_forward.1} parent=39 // pred_check_branch
                %188 = sbr.rel (0) target = $region55
              $region54: #{nmf_forward.1} parent=39 // pred_region
                loop: start=0, step=1, limit=1
                $region56: #{nmf_forward.1} parent=54 // loop_pre_header
                  _
                $region57: #{nmf_forward.1} parent=54 // loop_header
                  %s190 = sphi 0, %s194
                  %p191 = scmp.ge.s32.totalorder %s190, 1
                  %s195 = sphi %s162, %s162
                  %s196 = sphi %s159, %s159
                $region58: #{nmf_forward.1} parent=54 // loop_header_branch
                  %193 = sbr.rel (%p191) target = $region62
                $region59: #{nmf_forward.1} parent=54 // loop_body
                  %v197 = vld [vmem:[%s195] sm:$0xff]
                  %198 = vst [vmem:[%s196] sm:$0xff] %v197
                  %v199 = vld [vmem:[%s195 + $0x10] sm:$0xff]
                  %200 = vst [vmem:[%s196 + $0x8] sm:$0xff] %v199
                  %v201 = vld [vmem:[%s195 + $0x20] sm:$0xff]
                  %202 = vst [vmem:[%s196 + $0x10] sm:$0xff] %v201
                  %v203 = vld [vmem:[%s195 + $0x30] sm:$0xff]
                  %204 = vst [vmem:[%s196 + $0x18] sm:$0xff] %v203
                $region60: #{nmf_forward.1} parent=54 // loop_footer
                  %s194 = sadd.s32 1, %s190
                $region61: #{nmf_forward.1} parent=54 // loop_footer_branch
                  %189 = sbr.rel target = $region57
                $region62: #{nmf_forward.1} parent=54 // loop_exit
                  _
              $region55: #{nmf_forward.1} parent=39 // pred_fallthru
                _
              // Predicated region
              $region63: #{nmf_forward.1} parent=39 // pred_check
                _
              $region64: #{nmf_forward.1} parent=39 // pred_check_branch
                %206 = sbr.rel target = $region66
              $region65: #{nmf_forward.1} parent=39 // pred_region
                _
              $region66: #{nmf_forward.1} parent=39 // pred_fallthru
                _
            $region40: #{nmf_forward.1} parent=35 // pred_fallthru
              _
            // Predicated region
            $region41: #{nmf_forward.1} parent=35 // pred_check
              _
            $region42: #{nmf_forward.1} parent=35 // pred_check_branch
              %168 = sbr.rel target = $region44
            $region43: #{nmf_forward.1} parent=35 // pred_region
              %s170 = ssub.s32 256, 1
              loop: start=0, step=1, limit=1
              $region45: #{nmf_forward.1} parent=43 // loop_pre_header
                _
              $region46: #{nmf_forward.1} parent=43 // loop_header
                %s172 = sphi 0, %s176
                %p173 = scmp.ge.s32.totalorder %s172, 1
                %s177 = sphi %s162, %s162
                %s178 = sphi %s159, %s159
              $region47: #{nmf_forward.1} parent=43 // loop_header_branch
                %175 = sbr.rel (%p173) target = $region51
              $region48: #{nmf_forward.1} parent=43 // loop_body
                %v179 = vld [vmem:[%s177] sm:%s170]
                %180 = vst [vmem:[%s178] sm:%s170] %v179
                %v181 = vld [vmem:[%s177 + $0x10] sm:%s170]
                %182 = vst [vmem:[%s178 + $0x8] sm:%s170] %v181
                %v183 = vld [vmem:[%s177 + $0x20] sm:%s170]
                %184 = vst [vmem:[%s178 + $0x10] sm:%s170] %v183
                %v185 = vld [vmem:[%s177 + $0x30] sm:%s170]
                %186 = vst [vmem:[%s178 + $0x18] sm:%s170] %v185
              $region49: #{nmf_forward.1} parent=43 // loop_footer
                %s176 = sadd.s32 1, %s172
              $region50: #{nmf_forward.1} parent=43 // loop_footer_branch
                %171 = sbr.rel target = $region46
              $region51: #{nmf_forward.1} parent=43 // loop_exit
                _
            $region44: #{nmf_forward.1} parent=35 // pred_fallthru
              _
          $region36: #{nmf_forward.1} parent=31 // pred_fallthru
            _
          %207 = vnop
        $region32: #{nmf_forward.1} parent=27 // pred_fallthru
          _
      $region28: #{nmf_forward.1} parent=5 // pred_fallthru
        _
      %p208 = scmp.le.s32.totalorder 1, %s10
      %p209 = scmp.lt.s32.totalorder %s10, 3
      %p210 = pnand %p208, %p209
      %p211 = pneg %p210
      // Predicated region
      $region67: #{nmf_forward.1} parent=5 // pred_check
        _
      $region68: #{nmf_forward.1} parent=5 // pred_check_branch
        %213 = sbr.rel (%p210) target = $region70
      $region69: #{nmf_forward.1} parent=5 // pred_region
        %s214 = ssub.s32 %s10, 1
        %s215 = sand.u32 %s23, 1
        %s216 = sand.u32 %s23, 1
        %s217 = smul.addr %s216, 32
        %s218 = scalar_lea.vmem [#allocation2], %s217
        // Predicated region
        $region71: #{nmf_forward.1} parent=69 // pred_check
          %p219 = pneg %p36
        $region72: #{nmf_forward.1} parent=69 // pred_check_branch
          %221 = sbr.rel (%p219) target = $region74
        $region73: #{nmf_forward.1} parent=69 // pred_region
          _
        $region74: #{nmf_forward.1} parent=69 // pred_fallthru
          _
        %s222 = sand.u32 %s23, 1
        %s223 = sand.u32 %s23, 1
        %s224 = smul.addr %s223, 32
        %s225 = scalar_lea.vmem [#allocation2], %s224
        %p226 = pneg %p36
        %p227 = pneg %p33
        %p228 = pneg %p57
        %p229 = pneg %p54
        %p230 = pneg %p78
        %p231 = pneg %p75
        %p232 = pneg %p99
        %p233 = pneg %p96
        %p234 = pneg %p125
        %p235 = pneg %p122
        %s236 = smul.u32 2, %s15
        %p237 = scmp.lt.s32.totalorder %s236, 3
        %s238 = scalar_select %p237, %s236, 3
        %s239 = scalar_lea.vmem %s4, %s238
        %s240 = smul.u32 2, %s15
        %s241 = smul.u32 2, %s15
        %p242 = scmp.lt.s32.totalorder %s241, 3
        %s243 = scalar_select %p242, %s241, 3
        %s244 = scalar_lea.vmem %s4, %s243
        %s245 = smul.u32 2, %s15
        %v247 = vld [vmem:[%s218] sm:$0xff]
        %v248 = vld [vmem:[%s218 + $0x8] sm:$0xff]
        %v249 = vld [vmem:[%s218 + $0x10] sm:$0xff]
        %v250 = vld [vmem:[%s218 + $0x18] sm:$0xff]
        %v251 = vunpack.c.l.bf16 %v247
        %v252 = vunpack.c.h.bf16 %v247
        %v253 = vunpack.c.l.bf16 %v248
        %v254 = vunpack.c.h.bf16 %v248
        %v255 = vld [vmem:[%s3] sm:$0xff]
        %v256 = vld [vmem:[%s3 + $0x8] sm:$0xff]
        %v257 = vld [vmem:[%s3 + $0x10] sm:$0xff]
        %v258 = vld [vmem:[%s3 + $0x18] sm:$0xff]
        %v259 = vld [vmem:[%s3 + $0x20] sm:$0xff]
        %v260 = vld [vmem:[%s3 + $0x28] sm:$0xff]
        %v261 = vld [vmem:[%s3 + $0x30] sm:$0xff]
        %v262 = vld [vmem:[%s3 + $0x38] sm:$0xff]
        %v263 = vld [vmem:[%s3 + $0x40] sm:$0xff]
        %v264 = vld [vmem:[%s3 + $0x48] sm:$0x1]
        %v265 = vld [vmem:[%s1] sm:$0xf]
        %v266 = vld [vmem:[%s1 + $0x4] sm:$0xf]
        %v267 = vld [vmem:[%s1 + $0x8] sm:$0xf]
        %v268 = vld [vmem:[%s1 + $0xc] sm:$0xf]
        %270 = vset.pattern.permute.xlu0 0
        %271 = vperm.xlu0 %270, %v255
        %v272 = vpop.permute.xlu0 %271
        %275 = vset.pattern.permute.xlu0 0
        %276 = vperm.xlu0 %275, %v256
        %v277 = vpop.permute.xlu0 %276
        %280 = vset.pattern.permute.xlu0 0
        %281 = vperm.xlu0 %280, %v257
        %v282 = vpop.permute.xlu0 %281
        %285 = vset.pattern.permute.xlu0 0
        %286 = vperm.xlu0 %285, %v258
        %v287 = vpop.permute.xlu0 %286
        %v293 = vunpack.c.l.b16 %v265
        %v294 = vunpack.c.l.b16 %v266
        %v295 = vunpack.c.l.b16 %v267
        %v296 = vunpack.c.l.b16 %v268
        %v297 = vpack.c.b16 %v294, %v293
        %v298 = vpack.c.b16 %v296, %v295
        %v301 = vunpack.c.l.b16 %v249
        %v302 = vunpack.c.h.b16 %v249
        %v303 = vunpack.c.l.b16 %v250
        %v304 = vunpack.c.h.b16 %v250
        %v305 = vpack.c.b16 %v303, %v301
        %v306 = vpack.c.b16 %v304, %v302
        %vm309 = vcmask 130048
        %v311 = vsel %vm309, %v297, 0
        %v314 = vsel %vm309, %v298, 0
        %316 = vmatprep.subr.bf16.mxu0 0
        %317 = vmatpush1.bf16.msra.mxu0 0
        %318 = vmatprep.subr.bf16.mxu0 0
        %319 = vmatpush1.bf16.msra.mxu0 0
        %320 = vmatprep.subr.bf16.mxu0 0
        %321 = vmatpush1.bf16.msra.mxu0 0
        %322 = vmatprep.subr.bf16.mxu0 0
        %323 = vmatpush1.bf16.msra.mxu0 0
        %324 = vmatprep.subr.bf16.mxu0 0
        %325 = vmatpush1.bf16.msra.mxu0 0
        %326 = vmatprep.subr.bf16.mxu0 0
        %327 = vmatpush1.bf16.msra.mxu0 0
        %328 = vmatprep.subr.bf16.mxu0 0
        %329 = vmatpush1.bf16.msra.mxu0 0
        %330 = vmatprep.subr.bf16.mxu0 %v306
        %331 = vmatpush1.bf16.msra.mxu0 %v305
        %332 = vmatprep.subr.bf16.mxu0 0
        %333 = vmatpush2.bf16.msra.mxu0 0
        %334 = vmatprep.subr.bf16.mxu0 0
        %335 = vmatpush2.bf16.msra.mxu0 0
        %336 = vmatprep.subr.bf16.mxu0 0
        %337 = vmatpush2.bf16.msra.mxu0 0
        %338 = vmatprep.subr.bf16.mxu0 0
        %339 = vmatpush2.bf16.msra.mxu0 0
        %340 = vmatprep.subr.bf16.mxu0 0
        %341 = vmatpush2.bf16.msra.mxu0 0
        %342 = vmatprep.subr.bf16.mxu0 0
        %343 = vmatpush2.bf16.msra.mxu0 0
        %344 = vmatprep.subr.bf16.mxu0 0
        %345 = vmatpush2.bf16.msra.mxu0 0
        %346 = vmatprep.subr.bf16.mxu0 0
        %347 = vmatpush2.bf16.msra.mxu0 0
        %348 = vmatprep.mubr.bf16.mxu0 0
        %349 = vmatmul.mubr.bf16.gmra.mxu0 %v311
        %v350 = vpop.f32.mrf.mxu0
        %v351 = vadd.f32 %v272, %v350
        %v352 = vpop.f32.mrf.mxu0
        %v353 = vadd.f32 %v272, %v352
        %v354 = vpop.f32.mrf.mxu0
        %v355 = vadd.f32 %v277, %v354
        %v356 = vpop.f32.mrf.mxu0
        %v357 = vadd.f32 %v277, %v356
        %358 = vmatprep.mubr.bf16.mxu0 0
        %359 = vmatmul.mubr.bf16.gmra.mxu0 %v314
        %v360 = vpop.f32.mrf.mxu0
        %v361 = vadd.f32 %v282, %v360
        %v362 = vpop.f32.mrf.mxu0
        %v363 = vadd.f32 %v282, %v362
        %v364 = vpop.f32.mrf.mxu0
        %v365 = vadd.f32 %v287, %v364
        %v366 = vpop.f32.mrf.mxu0
        %v367 = vadd.f32 %v287, %v366
        %368 = vdwg.mxu0
        %v369 = vmax.f32 %v351, 0.0
        %v370 = vmax.f32 %v353, 0.0
        %v371 = vmax.f32 %v355, 0.0
        %v372 = vmax.f32 %v357, 0.0
        %v373 = vmax.f32 %v361, 0.0
        %v374 = vmax.f32 %v363, 0.0
        %v375 = vmax.f32 %v365, 0.0
        %v376 = vmax.f32 %v367, 0.0
        %v377 = vld [vmem:[%s2] sm:$0xf]
        %v378 = vld [vmem:[%s2 + $0x4] sm:$0xf]
        %v379 = vpack.c.bf16 %v371, %v369
        %v380 = vpack.c.bf16 %v372, %v370
        %v381 = vpack.c.bf16 %v375, %v373
        %v382 = vpack.c.bf16 %v376, %v374
        %384 = vset.pattern.permute.xlu0 0
        %385 = vperm.xlu0 %384, %v259
        %v386 = vpop.permute.xlu0 %385
        %389 = vset.pattern.permute.xlu0 0
        %390 = vperm.xlu0 %389, %v260
        %v391 = vpop.permute.xlu0 %390
        %v395 = vunpack.c.l.b16 %v377
        %v396 = vunpack.c.l.b16 %v378
        %v397 = vpack.c.b16 %v396, %v395
        %vm398 = vcmask 261120
        %v400 = vsel %vm398, %v397, 0
        %402 = vmatprep.subr.bf16.mxu0 0
        %403 = vmatpush1.bf16.msra.mxu0 0
        %404 = vmatprep.subr.bf16.mxu0 0
        %405 = vmatpush1.bf16.msra.mxu0 0
        %406 = vmatprep.subr.bf16.mxu0 0
        %407 = vmatpush1.bf16.msra.mxu0 0
        %408 = vmatprep.subr.bf16.mxu0 0
        %409 = vmatpush1.bf16.msra.mxu0 0
        %410 = vmatprep.subr.bf16.mxu0 0
        %411 = vmatpush1.bf16.msra.mxu0 0
        %412 = vmatprep.subr.bf16.mxu0 0
        %413 = vmatpush1.bf16.msra.mxu0 0
        %414 = vmatprep.subr.bf16.mxu0 %v382
        %415 = vmatpush1.bf16.msra.mxu0 %v381
        %416 = vmatprep.subr.bf16.mxu0 %v380
        %417 = vmatpush1.bf16.msra.mxu0 %v379
        %418 = vmatprep.subr.bf16.mxu0 0
        %419 = vmatpush2.bf16.msra.mxu0 0
        %420 = vmatprep.subr.bf16.mxu0 0
        %421 = vmatpush2.bf16.msra.mxu0 0
        %422 = vmatprep.subr.bf16.mxu0 0
        %423 = vmatpush2.bf16.msra.mxu0 0
        %424 = vmatprep.subr.bf16.mxu0 0
        %425 = vmatpush2.bf16.msra.mxu0 0
        %426 = vmatprep.subr.bf16.mxu0 0
        %427 = vmatpush2.bf16.msra.mxu0 0
        %428 = vmatprep.subr.bf16.mxu0 0
        %429 = vmatpush2.bf16.msra.mxu0 0
        %430 = vmatprep.subr.bf16.mxu0 0
        %431 = vmatpush2.bf16.msra.mxu0 0
        %432 = vmatprep.subr.bf16.mxu0 0
        %433 = vmatpush2.bf16.msra.mxu0 0
        %434 = vmatprep.mubr.bf16.mxu0 0
        %435 = vmatmul.mubr.bf16.gmra.mxu0 %v400
        %v436 = vpop.f32.mrf.mxu0
        %v437 = vadd.f32 %v386, %v436
        %v438 = vpop.f32.mrf.mxu0
        %v439 = vadd.f32 %v386, %v438
        %v440 = vpop.f32.mrf.mxu0
        %v441 = vadd.f32 %v391, %v440
        %v442 = vpop.f32.mrf.mxu0
        %v443 = vadd.f32 %v391, %v442
        %444 = vdwg.mxu0
        %v445 = vmax.f32 %v437, 0.0
        %v446 = vmax.f32 %v439, 0.0
        %v447 = vmax.f32 %v441, 0.0
        %v448 = vmax.f32 %v443, 0.0
        %v449 = vmul.f32 %v251, %v253
        %v450 = vmul.f32 %v252, %v254
        %452 = vset.pattern.permute.xlu0 0
        %453 = vperm.xlu0 %452, %v261
        %v454 = vpop.permute.xlu0 %453
        %v456 = vmul.f32 %v449, %v454
        %v457 = vmul.f32 %v450, %v454
        %v458 = vrot.slane %v456, 4
        %v459 = vadd.f32 %v456, %v458
        %v460 = vrot.slane %v459, 2
        %v461 = vadd.f32 %v459, %v460
        %v462 = vrot.slane %v461, 1
        %v463 = vadd.f32 %v461, %v462
        %v464 = vrot.slane %v457, 4
        %v465 = vadd.f32 %v457, %v464
        %v466 = vrot.slane %v465, 2
        %v467 = vadd.f32 %v465, %v466
        %v468 = vrot.slane %v467, 1
        %v469 = vadd.f32 %v467, %v468
        %471 = vset.pattern.permute.xlu0 0
        %472 = vperm.xlu0 %471, %v262
        %v473 = vpop.permute.xlu0 %472
        %476 = vset.pattern.permute.xlu0 0
        %477 = vperm.xlu0 %476, %v263
        %v478 = vpop.permute.xlu0 %477
        %v480 = vmul.f32 %v445, %v473
        %v481 = vmul.f32 %v446, %v473
        %v482 = vmul.f32 %v447, %v478
        %v483 = vmul.f32 %v448, %v478
        %v484 = vadd.f32 %v480, %v482
        %v485 = vrot.slane %v484, 4
        %v486 = vadd.f32 %v484, %v485
        %v487 = vrot.slane %v486, 2
        %v488 = vadd.f32 %v486, %v487
        %v489 = vrot.slane %v488, 1
        %v490 = vadd.f32 %v488, %v489
        %v491 = vadd.f32 %v481, %v483
        %v492 = vrot.slane %v491, 4
        %v493 = vadd.f32 %v491, %v492
        %v494 = vrot.slane %v493, 2
        %v495 = vadd.f32 %v493, %v494
        %v496 = vrot.slane %v495, 1
        %v497 = vadd.f32 %v495, %v496
        %v498 = vadd.f32 %v463, %v490
        %v499 = vadd.f32 %v469, %v497
        %501 = vset.pattern.permute.xlu0 0
        %502 = vperm.xlu0 %501, %v264
        %v503 = vpop.permute.xlu0 %502
        %v505 = vadd.f32 %v498, %v503
        %v506 = vadd.f32 %v499, %v503
        %v507 = vxor.u32 %v505, 2147483648
        %v508 = vxor.u32 %v506, 2147483648
        %v509 = vmul.f32 %v507, 1.442695
        %v510 = vpow.pop %v509
        %v511 = vmul.f32 %v508, 1.442695
        %v512 = vpow.pop %v511
        %v513 = vadd.f32 %v510, 1.0
        %v514 = vadd.f32 %v512, 1.0
        %v515 = vrcp.pop %v513
        %v516 = vmul.f32 1.0, %v515
        %v517 = vrcp.pop %v514
        %v518 = vmul.f32 1.0, %v517
        %v521 = vcombine.low %v516, %v518
        %v523 = vunpack.c.l.s4 1966171168
        %v524 = vunpack.c.0.s8 %v523
        %v525 = vlaneseq
        %v526 = vshrl.u32 %v525, 7
        %v527 = vsub.s32 %v524, %v526
        %v528 = vrot.slane %v521, %v527
        %v530 = vunpack.c.l.s4 1966171168
        %v531 = vunpack.c.0.s8 %v530
        %v532 = vlaneseq
        %v533 = vshrl.u32 %v532, 7
        %v534 = vsub.s32 %v531, %v533
        %v535 = vrot.slane %v528, %v534
        %v537 = vlaneseq
        %vm538 = vcmp.ge.s32.totalorder %v537, 0
        %vm539 = vcmp.lt.s32.totalorder %v537, 256
        %vm540 = vmand %vm538, %vm539
        %541 = vst.msk [vmem:[%s244] sm:$0x3] %vm540, %v535
        %s542 = smul.u32 2, %s15
        %p543 = scmp.lt.s32.totalorder %s542, 3
        %s544 = scalar_select %p543, %s542, 3
        %s545 = scalar_lea.vmem %s4, %s544
        // Predicated region
        $region75: #{nmf_forward.1} parent=69 // pred_check
          %p546 = pneg %p122
        $region76: #{nmf_forward.1} parent=69 // pred_check_branch
          %548 = sbr.rel (%p546) target = $region78
        $region77: #{nmf_forward.1} parent=69 // pred_region
          %s549 = smul.u32 2, %s15
        $region78: #{nmf_forward.1} parent=69 // pred_fallthru
          _
      $region70: #{nmf_forward.1} parent=5 // pred_fallthru
        _
      %p550 = scmp.le.s32.totalorder 2, %s10
      // Predicated region
      $region79: #{nmf_forward.1} parent=5 // pred_check
        %p551 = pneg %p550
      $region80: #{nmf_forward.1} parent=5 // pred_check_branch
        %553 = sbr.rel (%p551) target = $region82
      $region81: #{nmf_forward.1} parent=5 // pred_region
        %s554 = ssub.s32 %s10, 2
        // Predicated region
        $region83: #{nmf_forward.1} parent=81 // pred_check
          %p555 = pneg %p128
        $region84: #{nmf_forward.1} parent=81 // pred_check_branch
          %557 = sbr.rel (%p555) target = $region86
        $region85: #{nmf_forward.1} parent=81 // pred_region
          %s558 = smul.u32 2, %s16
          %p559 = scmp.lt.s32.totalorder %s558, 3
          %s560 = scalar_select %p559, %s558, 3
          %s561 = scalar_lea.vmem %s4, %s560
        $region86: #{nmf_forward.1} parent=81 // pred_fallthru
          _
      $region82: #{nmf_forward.1} parent=5 // pred_fallthru
        _
    $region6: #{nmf_forward.1} parent=1 // loop_footer
      %s14 = sadd.s32 1, %s10
    $region7: #{nmf_forward.1} parent=1 // loop_footer_branch
      %9 = sbr.rel target = $region3
    $region8: #{nmf_forward.1} parent=1 // loop_exit
      _

</llo_original>
